<compile_context>
chip_gen: v6e
topology: v6e:2x2x1
jax: 0.10.0
libtpu: 0.0.40
codegen_flags: <defaults>
</compile_context>

<pallas_src>
import functools

import jax
import jax.numpy as jnp
from jax.experimental import pallas as pl
from jax.experimental.pallas import tpu as pltpu


def _round_up(n, m):
    return ((n + m - 1) // m) * m


def _pad_rows(x, rows):
    r = x.shape[0]
    if r == rows:
        return x
    return jnp.pad(x, ((0, rows - r), (0, 0)))


def _pad2d(x, rows, cols):
    r, c = x.shape
    if r == rows and c == cols:
        return x
    return jnp.pad(x, ((0, rows - r), (0, cols - c)))


def _fused_two_head_kernel(sx_ref, sw_ref, sb_ref, tx_ref, tw_ref, tb_ref,
                           so_ref, to_ref):
    # structure head: [Tb, Ds] @ [Ds, Lp] + [1, Lp]  (bf16 MXU, f32 accumulate)
    so_ref[...] = (
        jnp.dot(sx_ref[...].astype(jnp.bfloat16), sw_ref[...],
                preferred_element_type=jnp.float32)
        + sb_ref[...]
    ).astype(so_ref.dtype)
    # text head: [Tb, Dt] @ [Dt, Lp] + [1, Lp]
    to_ref[...] = (
        jnp.dot(tx_ref[...].astype(jnp.bfloat16), tw_ref[...],
                preferred_element_type=jnp.float32)
        + tb_ref[...]
    ).astype(to_ref.dtype)


# Leave headroom under v7x's 64 MiB physical VMEM (and well under the scoped
# limit we request below).
_VMEM_BUDGET_BYTES = 40 * 1024 * 1024
_VMEM_LIMIT_BYTES = 48 * 1024 * 1024


def _pick_tile_b(batch, d_text, d_struct, l_pad):
    """Largest batch tile (preferably MXU-sized 256) whose pipeline fits VMEM."""
    # Resident weights (bf16) + biases (f32); count 2 buffers conservatively.
    resident = 2 * ((d_text + d_struct) * l_pad * 2 + 2 * l_pad * 4)
    tile = 256
    while tile > 8:
        per_tile = 2 * tile * (d_text + d_struct) * 4   # double-buffered f32 acts
        per_tile += 2 * 2 * tile * l_pad * 4            # double-buffered f32 outs (2 heads)
        if resident + per_tile <= _VMEM_BUDGET_BYTES:
            break
        tile //= 2
    tile = max(tile, 8)
    # No point in a tile larger than the sublane-rounded batch.
    return min(tile, _round_up(batch, 8))


@functools.partial(jax.jit, static_argnums=(6,))
def _fused_forward(text_x, struct_x, text_w_p, text_b_p, struct_w_p,
                   struct_b_p, latent_dim):
    """Runs both projection heads in one batch-tiled pallas_call.

    text_x:     [B, Dt]        f32
    struct_x:   [B, Ds]        f32
    *_w_p:      [D_in, L_pad]  bf16 (pre-transposed, lane-padded, cast at init)
    *_b_p:      [1, L_pad]     f32
    returns (structure_repr [B, L], description_repr [B, L])
    """
    B, Dt = text_x.shape
    _, Ds = struct_x.shape
    Lp = text_w_p.shape[1]

    tile_b = _pick_tile_b(B, Dt, Ds, Lp)
    Bp = _round_up(B, tile_b)

    # Only the batch axis is padded (no-op when B is already a multiple of
    # tile_b); the K dim stays at its true size via full-extent blocks.
    tx = _pad_rows(text_x, Bp)
    sx = _pad_rows(struct_x, Bp)

    grid = (Bp // tile_b,)

    act_spec_s = pl.BlockSpec((tile_b, Ds), lambda i: (i, 0))
    act_spec_t = pl.BlockSpec((tile_b, Dt), lambda i: (i, 0))
    w_spec_s = pl.BlockSpec((Ds, Lp), lambda i: (0, 0))      # resident, DMA'd once
    w_spec_t = pl.BlockSpec((Dt, Lp), lambda i: (0, 0))      # resident, DMA'd once
    b_spec = pl.BlockSpec((1, Lp), lambda i: (0, 0))          # resident, DMA'd once
    out_spec = pl.BlockSpec((tile_b, Lp), lambda i: (i, 0))   # lane-dense stores

    struct_out_p, text_out_p = pl.pallas_call(
        _fused_two_head_kernel,
        out_shape=(
            jax.ShapeDtypeStruct((Bp, Lp), jnp.float32),
            jax.ShapeDtypeStruct((Bp, Lp), jnp.float32),
        ),
        grid=grid,
        in_specs=[act_spec_s, w_spec_s, b_spec, act_spec_t, w_spec_t, b_spec],
        out_specs=(out_spec, out_spec),
        compiler_params=pltpu.CompilerParams(
            dimension_semantics=("parallel",),      # 2x on v7x megacore
            vmem_limit_bytes=_VMEM_LIMIT_BYTES,
        ),
    )(sx, struct_w_p, struct_b_p, tx, text_w_p, text_b_p)

    return struct_out_p[:B, :latent_dim], text_out_p[:B, :latent_dim]


class ProteinTextModelPallas:
    """Mirrors ProteinTextModel.forward: returns (structure_repr, description_repr)."""

    def __init__(self, text_in_dim, structure_in_dim, latent_dim, key):
        k1, k2, k3, k4 = jax.random.split(key, 4)
        # Deterministic synthetic parameters (PyTorch Linear shape conventions:
        # weight [out, in], bias [out]).  Kept in f32 as the "master" copy.
        self.text_w = jax.random.normal(k1, (latent_dim, text_in_dim), jnp.float32) * 0.02
        self.text_b = jax.random.normal(k2, (latent_dim,), jnp.float32) * 0.02
        self.struct_w = jax.random.normal(k3, (latent_dim, structure_in_dim), jnp.float32) * 0.02
        self.struct_b = jax.random.normal(k4, (latent_dim,), jnp.float32) * 0.02
        self.latent_dim = latent_dim

        # One-time layout prep (outside the kernel): transpose to [D_in, L],
        # pad the lane (output) dim to a multiple of 128, and cast weights to
        # bf16 for the MXU.  K dim is left unpadded (full-extent block in the
        # kernel), so activations never need a K-pad per call.
        Lp = _round_up(latent_dim, 128)
        self._text_w_p = _pad2d(self.text_w.T, text_in_dim, Lp).astype(jnp.bfloat16)
        self._struct_w_p = _pad2d(self.struct_w.T, structure_in_dim, Lp).astype(jnp.bfloat16)
        self._text_b_p = _pad2d(self.text_b.reshape(1, latent_dim), 1, Lp)
        self._struct_b_p = _pad2d(self.struct_b.reshape(1, latent_dim), 1, Lp)

    def __call__(self, text_embeddings, structure_embeddings):
        return _fused_forward(
            text_embeddings, structure_embeddings,
            self._text_w_p, self._text_b_p,
            self._struct_w_p, self._struct_b_p,
            self.latent_dim,
        )


if __name__ == "__main__":
    key = jax.random.PRNGKey(0)
    k_model, k_text, k_struct = jax.random.split(key, 3)

    batch = 2
    text_dim = 32
    structure_dim = 48
    latent_dim = 16

    text_embeddings = jax.random.normal(k_text, (batch, text_dim), jnp.float32)
    structure_embeddings = jax.random.normal(k_struct, (batch, structure_dim), jnp.float32)

    model = ProteinTextModelPallas(text_dim, structure_dim, latent_dim, k_model)
    structure_repr, description_repr = model(text_embeddings, structure_embeddings)
    jax.block_until_ready((structure_repr, description_repr))

    # Reference check in plain JAX (f32).  Tolerance relaxed because the
    # kernel uses bf16 MXU inputs (f32 accumulation).
    ref_struct = structure_embeddings @ model.struct_w.T + model.struct_b
    ref_text = text_embeddings @ model.text_w.T + model.text_b
    assert structure_repr.shape == (batch, latent_dim)
    assert description_repr.shape == (batch, latent_dim)
    assert jnp.allclose(structure_repr, ref_struct, atol=1e-2, rtol=1e-2)
    assert jnp.allclose(description_repr, ref_text, atol=1e-2, rtol=1e-2)

    print("KERNEL_OK")
</pallas_src>

<mosaic_0001>
module attributes {stable_mosaic.version = 11 : i64} {
  func.func @_fused_two_head_kernel(%arg0: i32, %arg1: memref<8x48xf32, #tpu.memory_space<vmem>>, %arg2: memref<48x128xbf16, #tpu.memory_space<vmem>>, %arg3: memref<1x128xf32, #tpu.memory_space<vmem>>, %arg4: memref<8x32xf32, #tpu.memory_space<vmem>>, %arg5: memref<32x128xbf16, #tpu.memory_space<vmem>>, %arg6: memref<1x128xf32, #tpu.memory_space<vmem>>, %arg7: memref<8x128xf32, #tpu.memory_space<vmem>>, %arg8: memref<8x128xf32, #tpu.memory_space<vmem>>) attributes {dimension_semantics = [#tpu.dimension_semantics<parallel>], iteration_bounds = array<i64: 1>, scalar_prefetch = 0 : i64, scratch_operands = 0 : i64, tpu.core_type = #tpu.core_type<tc>, window_params = [{transform_indices = @transform_0, window_bounds = array<i64: 8, 48>}, {pipeline_mode = #tpu.pipeline_mode<synchronous>, transform_indices = @transform_1, window_bounds = array<i64: 48, 128>}, {pipeline_mode = #tpu.pipeline_mode<synchronous>, transform_indices = @transform_2, window_bounds = array<i64: 1, 128>}, {transform_indices = @transform_3, window_bounds = array<i64: 8, 32>}, {pipeline_mode = #tpu.pipeline_mode<synchronous>, transform_indices = @transform_4, window_bounds = array<i64: 32, 128>}, {pipeline_mode = #tpu.pipeline_mode<synchronous>, transform_indices = @transform_5, window_bounds = array<i64: 1, 128>}, {transform_indices = @transform_6, window_bounds = array<i64: 8, 128>}, {transform_indices = @transform_7, window_bounds = array<i64: 8, 128>}]} {
    %c0 = arith.constant 0 : index
    %c0_0 = arith.constant 0 : index
    %0 = vector.load %arg1[%c0, %c0_0] : memref<8x48xf32, #tpu.memory_space<vmem>>, vector<8x48xf32>
    %1 = arith.truncf %0 : vector<8x48xf32> to vector<8x48xbf16>
    %c0_1 = arith.constant 0 : index
    %c0_2 = arith.constant 0 : index
    %2 = vector.load %arg2[%c0_1, %c0_2] : memref<48x128xbf16, #tpu.memory_space<vmem>>, vector<48x128xbf16>
    %cst = arith.constant dense<0.000000e+00> : vector<8x128xf32>
    %3 = tpu.matmul %1, %2, %cst {dimension_numbers = #tpu.dot_dimension_numbers<[1], [0], [0], [1], [0, 0, 1, 1], [], []>} : vector<8x48xbf16>, vector<48x128xbf16>, vector<8x128xf32> -> vector<8x128xf32>
    %c0_3 = arith.constant 0 : index
    %c0_4 = arith.constant 0 : index
    %4 = vector.load %arg3[%c0_3, %c0_4] : memref<1x128xf32, #tpu.memory_space<vmem>>, vector<1x128xf32>
    %5 = vector.broadcast %4 : vector<1x128xf32> to vector<8x128xf32>
    %6 = arith.addf %3, %5 : vector<8x128xf32>
    %c0_5 = arith.constant 0 : index
    %c0_6 = arith.constant 0 : index
    %7 = vector.load %arg7[%c0_5, %c0_6] : memref<8x128xf32, #tpu.memory_space<vmem>>, vector<8x128xf32>
    tpu.vector_store %arg7[%c0_5, %c0_6], %6 {strides = array<i32>} : memref<8x128xf32, #tpu.memory_space<vmem>>, vector<8x128xf32>,
    %c0_7 = arith.constant 0 : index
    %c0_8 = arith.constant 0 : index
    %8 = vector.load %arg4[%c0_7, %c0_8] : memref<8x32xf32, #tpu.memory_space<vmem>>, vector<8x32xf32>
    %9 = arith.truncf %8 : vector<8x32xf32> to vector<8x32xbf16>
    %c0_9 = arith.constant 0 : index
    %c0_10 = arith.constant 0 : index
    %10 = vector.load %arg5[%c0_9, %c0_10] : memref<32x128xbf16, #tpu.memory_space<vmem>>, vector<32x128xbf16>
    %cst_11 = arith.constant dense<0.000000e+00> : vector<8x128xf32>
    %11 = tpu.matmul %9, %10, %cst_11 {dimension_numbers = #tpu.dot_dimension_numbers<[1], [0], [0], [1], [0, 0, 1, 1], [], []>} : vector<8x32xbf16>, vector<32x128xbf16>, vector<8x128xf32> -> vector<8x128xf32>
    %c0_12 = arith.constant 0 : index
    %c0_13 = arith.constant 0 : index
    %12 = vector.load %arg6[%c0_12, %c0_13] : memref<1x128xf32, #tpu.memory_space<vmem>>, vector<1x128xf32>
    %13 = vector.broadcast %12 : vector<1x128xf32> to vector<8x128xf32>
    %14 = arith.addf %11, %13 : vector<8x128xf32>
    %c0_14 = arith.constant 0 : index
    %c0_15 = arith.constant 0 : index
    %15 = vector.load %arg8[%c0_14, %c0_15] : memref<8x128xf32, #tpu.memory_space<vmem>>, vector<8x128xf32>
    tpu.vector_store %arg8[%c0_14, %c0_15], %14 {strides = array<i32>} : memref<8x128xf32, #tpu.memory_space<vmem>>, vector<8x128xf32>,
    return
  }
  func.func @transform_0(%arg0: i32) -> (i32, i32) {
    %c0_i32 = arith.constant 0 : i32
    %c0_i32_0 = arith.constant 0 : i32
    return %arg0, %c0_i32 : i32, i32
  }
  func.func @transform_1(%arg0: i32) -> (i32, i32) {
    %c0_i32 = arith.constant 0 : i32
    %c0_i32_0 = arith.constant 0 : i32
    %c0_i32_1 = arith.constant 0 : i32
    return %c0_i32, %c0_i32_0 : i32, i32
  }
  func.func @transform_2(%arg0: i32) -> (i32, i32) {
    %c0_i32 = arith.constant 0 : i32
    %c0_i32_0 = arith.constant 0 : i32
    %c0_i32_1 = arith.constant 0 : i32
    return %c0_i32, %c0_i32_0 : i32, i32
  }
  func.func @transform_3(%arg0: i32) -> (i32, i32) {
    %c0_i32 = arith.constant 0 : i32
    %c0_i32_0 = arith.constant 0 : i32
    return %arg0, %c0_i32 : i32, i32
  }
  func.func @transform_4(%arg0: i32) -> (i32, i32) {
    %c0_i32 = arith.constant 0 : i32
    %c0_i32_0 = arith.constant 0 : i32
    %c0_i32_1 = arith.constant 0 : i32
    return %c0_i32, %c0_i32_0 : i32, i32
  }
  func.func @transform_5(%arg0: i32) -> (i32, i32) {
    %c0_i32 = arith.constant 0 : i32
    %c0_i32_0 = arith.constant 0 : i32
    %c0_i32_1 = arith.constant 0 : i32
    return %c0_i32, %c0_i32_0 : i32, i32
  }
  func.func @transform_6(%arg0: i32) -> (i32, i32) {
    %c0_i32 = arith.constant 0 : i32
    %c0_i32_0 = arith.constant 0 : i32
    return %arg0, %c0_i32 : i32, i32
  }
  func.func @transform_7(%arg0: i32) -> (i32, i32) {
    %c0_i32 = arith.constant 0 : i32
    %c0_i32_0 = arith.constant 0 : i32
    return %arg0, %c0_i32 : i32, i32
  }
}

</mosaic_0001>

<llo_original>
// kernel: _fused_forward.1
$region0: #{_fused_forward.1}
  #allocation0 [shape = 'u32[]', space=smem, size = 0x4, offset = 0x4, fixed_abs, tag = 'smem constant byte address 0x4 - core index']
  #allocation1 [shape = 'u32[144,128]{1,0:T(1,128)}', space=vmem, size = 0x12000, scoped, tag = 'internal scratch']
  %s0 = inlined_call_operand.vmem [shape: f32[8,48], index: 0, kind: input, shape index: {}]
  %s1 = inlined_call_operand.vmem [shape: bf16[48,128], index: 1, kind: input, shape index: {}]
  %s2 = inlined_call_operand.vmem [shape: f32[1,128], index: 2, kind: input, shape index: {}]
  %s3 = inlined_call_operand.vmem [shape: f32[8,32], index: 3, kind: input, shape index: {}]
  %s4 = inlined_call_operand.hbm [shape: bf16[32,128], index: 4, kind: input, shape index: {}]
  %s5 = inlined_call_operand.vmem [shape: f32[1,128], index: 5, kind: input, shape index: {}]
  %s6 = inlined_call_operand.vmem [shape: f32[8,128], index: 6, kind: output, shape index: {0}]
  %s7 = inlined_call_operand.vmem [shape: f32[8,128], index: 7, kind: output, shape index: {1}]
  %8 = xla_tuple %s6, %s7
  %s9 = sld [smem:[#allocation0]]
  $region46: #{_fused_forward.1} parent=0
    _
  %s11 = ssub.s32 1, %s9
  %s12 = scalar_select 0, %s11, %s9
  $region1: #{_fused_forward.1} parent=0
    #allocation2 [shape = 'u8[8192]{0}', space=vmem, size = 0x2000, scoped, tag = 'input window, operand 4, single buffered']
    #allocation3 [shape = 's32[1]{0}', space=sflag, size = 0x4, scoped, tag = 'scoped memory for _fused_forward.1']
    %13 = vsyncpa [#allocation3], 0
    // Predicated region
    $region2: #{_fused_forward.1} parent=1 // pred_check
      _
    $region3: #{_fused_forward.1} parent=1 // pred_check_branch
      %15 = sbr.rel (0) target = $region5
    $region4: #{_fused_forward.1} parent=1 // pred_region
      _
    $region5: #{_fused_forward.1} parent=1 // pred_fallthru
      _
    // Predicated region
    $region6: #{_fused_forward.1} parent=1 // pred_check
      _
    $region7: #{_fused_forward.1} parent=1 // pred_check_branch
      %17 = sbr.rel (0) target = $region9
    $region8: #{_fused_forward.1} parent=1 // pred_region
      _
    $region9: #{_fused_forward.1} parent=1 // pred_fallthru
      _
    // Predicated region
    $region10: #{_fused_forward.1} parent=1 // pred_check
      _
    $region11: #{_fused_forward.1} parent=1 // pred_check_branch
      %19 = sbr.rel (0) target = $region13
    $region12: #{_fused_forward.1} parent=1 // pred_region
      _
    $region13: #{_fused_forward.1} parent=1 // pred_fallthru
      _
    // Predicated region
    $region14: #{_fused_forward.1} parent=1 // pred_check
      _
    $region15: #{_fused_forward.1} parent=1 // pred_check_branch
      %21 = sbr.rel (0) target = $region17
    $region16: #{_fused_forward.1} parent=1 // pred_region
      _
    $region17: #{_fused_forward.1} parent=1 // pred_fallthru
      _
    // Predicated region
    $region18: #{_fused_forward.1} parent=1 // pred_check
      _
    $region19: #{_fused_forward.1} parent=1 // pred_check_branch
      %23 = sbr.rel (0) target = $region21
    $region20: #{_fused_forward.1} parent=1 // pred_region
      %s25 = ssub.s32 256, 256
      %26 = vsyncadd [#allocation3], %s25
      %s27 = sshll.u32 [#allocation2], 4
      %s28 = int_to_ptr.vmem [resolvable:$true] %s27
      %33 = dma.hbm_to_vmem [thread:$0]  %s4, 256, %s28, [#allocation3], 64, 64, 4
    $region21: #{_fused_forward.1} parent=1 // pred_fallthru
      _
    // Predicated region
    $region22: #{_fused_forward.1} parent=1 // pred_check
      _
    $region23: #{_fused_forward.1} parent=1 // pred_check_branch
      %35 = sbr.rel (0) target = $region25
    $region24: #{_fused_forward.1} parent=1 // pred_region
      _
    $region25: #{_fused_forward.1} parent=1 // pred_fallthru
      _
    // Predicated region
    $region26: #{_fused_forward.1} parent=1 // pred_check
      _
    $region27: #{_fused_forward.1} parent=1 // pred_check_branch
      %37 = sbr.rel (0) target = $region29
    $region28: #{_fused_forward.1} parent=1 // pred_region
      %38 = dma.done [#allocation3], 256
    $region29: #{_fused_forward.1} parent=1 // pred_fallthru
      _
    %v40 = vld [vmem:[%s0] sm:$0xff]
    %v41 = vpack.c.bf16 %v40, %v40
    %v42 = vld [vmem:[%s1] sm:$0xf]
    %v43 = vld [vmem:[%s1 + $0x4] sm:$0xf]
    %v44 = vld [vmem:[%s1 + $0x8] sm:$0xf]
    %v45 = vld [vmem:[%s1 + $0xc] sm:$0xf]
    %v46 = vld [vmem:[%s1 + $0x10] sm:$0xf]
    %v47 = vld [vmem:[%s1 + $0x14] sm:$0xf]
    %v48 = vld [vmem:[%s2] sm:$0x1]
    %v50 = vlaneseq
    %v51 = vshrl.u32 %v50, 7
    %v52 = vsub.s32 0, %v51
    %v53 = vrot.slane %v48, %v52
    %v61 = vunpack.c.l.b16 %v42
    %v62 = vunpack.c.l.b16 %v43
    %v63 = vunpack.c.l.b16 %v44
    %v64 = vunpack.c.l.b16 %v45
    %v65 = vunpack.c.l.b16 %v46
    %v66 = vunpack.c.l.b16 %v47
    %v67 = vpack.c.b16 %v62, %v61
    %v68 = vpack.c.b16 %v64, %v63
    %v69 = vpack.c.b16 %v66, %v65
    %vm73 = vcmask 392192
    %v75 = vsel %vm73, %v41, 0
    %77 = vmatprep.subr.bf16.mxu0 0
    %78 = vmatpush1.bf16.msra.mxu0 0
    %79 = vmatprep.subr.bf16.mxu0 0
    %80 = vmatpush1.bf16.msra.mxu0 0
    %81 = vmatprep.subr.bf16.mxu0 0
    %82 = vmatpush1.bf16.msra.mxu0 0
    %83 = vmatprep.subr.bf16.mxu0 0
    %84 = vmatpush1.bf16.msra.mxu0 0
    %85 = vmatprep.subr.bf16.mxu0 0
    %86 = vmatpush1.bf16.msra.mxu0 0
    %87 = vmatprep.subr.bf16.mxu0 0
    %88 = vmatpush1.bf16.msra.mxu0 %v69
    %89 = vmatprep.subr.bf16.mxu0 0
    %90 = vmatpush1.bf16.msra.mxu0 %v68
    %91 = vmatprep.subr.bf16.mxu0 0
    %92 = vmatpush1.bf16.msra.mxu0 %v67
    %93 = vmatprep.subr.bf16.mxu0 0
    %94 = vmatpush2.bf16.msra.mxu0 0
    %95 = vmatprep.subr.bf16.mxu0 0
    %96 = vmatpush2.bf16.msra.mxu0 0
    %97 = vmatprep.subr.bf16.mxu0 0
    %98 = vmatpush2.bf16.msra.mxu0 0
    %99 = vmatprep.subr.bf16.mxu0 0
    %100 = vmatpush2.bf16.msra.mxu0 0
    %101 = vmatprep.subr.bf16.mxu0 0
    %102 = vmatpush2.bf16.msra.mxu0 0
    %103 = vmatprep.subr.bf16.mxu0 0
    %104 = vmatpush2.bf16.msra.mxu0 0
    %105 = vmatprep.subr.bf16.mxu0 0
    %106 = vmatpush2.bf16.msra.mxu0 0
    %107 = vmatprep.subr.bf16.mxu0 0
    %108 = vmatpush2.bf16.msra.mxu0 0
    %109 = vmatprep.mubr.bf16.mxu0 0
    %110 = vmatmul.mubr.bf16.gmra.mxu0 %v75
    %v111 = vpop.f32.mrf.mxu0
    %v112 = vadd.f32 %v53, %v111
    %v113 = vpop.f32.mrf.mxu0
    %v114 = vpop.f32.mrf.mxu0
    %v115 = vpop.f32.mrf.mxu0
    %116 = vdwg.mxu0
    %117 = vst [vmem:[%s6] sm:$0xff] %v112
    %v118 = vld [vmem:[%s3] sm:$0xff]
    %v119 = vpack.c.bf16 %v118, %v118
    %v120 = vld [vmem:[#allocation2] sm:$0xf]
    %v121 = vld [vmem:[#allocation2 + $0x4] sm:$0xf]
    %v122 = vld [vmem:[#allocation2 + $0x8] sm:$0xf]
    %v123 = vld [vmem:[#allocation2 + $0xc] sm:$0xf]
    %v124 = vld [vmem:[%s5] sm:$0x1]
    %v126 = vlaneseq
    %v127 = vshrl.u32 %v126, 7
    %v128 = vsub.s32 0, %v127
    %v129 = vrot.slane %v124, %v128
    %v135 = vunpack.c.l.b16 %v120
    %v136 = vunpack.c.l.b16 %v121
    %v137 = vunpack.c.l.b16 %v122
    %v138 = vunpack.c.l.b16 %v123
    %v139 = vpack.c.b16 %v136, %v135
    %v140 = vpack.c.b16 %v138, %v137
    %vm143 = vcmask 261120
    %v145 = vsel %vm143, %v119, 0
    %147 = vmatprep.subr.bf16.mxu0 0
    %148 = vmatpush1.bf16.msra.mxu0 0
    %149 = vmatprep.subr.bf16.mxu0 0
    %150 = vmatpush1.bf16.msra.mxu0 0
    %151 = vmatprep.subr.bf16.mxu0 0
    %152 = vmatpush1.bf16.msra.mxu0 0
    %153 = vmatprep.subr.bf16.mxu0 0
    %154 = vmatpush1.bf16.msra.mxu0 0
    %155 = vmatprep.subr.bf16.mxu0 0
    %156 = vmatpush1.bf16.msra.mxu0 0
    %157 = vmatprep.subr.bf16.mxu0 0
    %158 = vmatpush1.bf16.msra.mxu0 0
    %159 = vmatprep.subr.bf16.mxu0 0
    %160 = vmatpush1.bf16.msra.mxu0 %v140
    %161 = vmatprep.subr.bf16.mxu0 0
    %162 = vmatpush1.bf16.msra.mxu0 %v139
    %163 = vmatprep.subr.bf16.mxu0 0
    %164 = vmatpush2.bf16.msra.mxu0 0
    %165 = vmatprep.subr.bf16.mxu0 0
    %166 = vmatpush2.bf16.msra.mxu0 0
    %167 = vmatprep.subr.bf16.mxu0 0
    %168 = vmatpush2.bf16.msra.mxu0 0
    %169 = vmatprep.subr.bf16.mxu0 0
    %170 = vmatpush2.bf16.msra.mxu0 0
    %171 = vmatprep.subr.bf16.mxu0 0
    %172 = vmatpush2.bf16.msra.mxu0 0
    %173 = vmatprep.subr.bf16.mxu0 0
    %174 = vmatpush2.bf16.msra.mxu0 0
    %175 = vmatprep.subr.bf16.mxu0 0
    %176 = vmatpush2.bf16.msra.mxu0 0
    %177 = vmatprep.subr.bf16.mxu0 0
    %178 = vmatpush2.bf16.msra.mxu0 0
    %179 = vmatprep.mubr.bf16.mxu0 0
    %180 = vmatmul.mubr.bf16.gmra.mxu0 %v145
    %v181 = vpop.f32.mrf.mxu0
    %v182 = vadd.f32 %v129, %v181
    %v183 = vpop.f32.mrf.mxu0
    %v184 = vpop.f32.mrf.mxu0
    %v185 = vpop.f32.mrf.mxu0
    %186 = vdwg.mxu0
    %187 = vst [vmem:[%s7] sm:$0xff] %v182
    // Predicated region
    $region30: #{_fused_forward.1} parent=1 // pred_check
      _
    $region31: #{_fused_forward.1} parent=1 // pred_check_branch
      %189 = sbr.rel (0) target = $region33
    $region32: #{_fused_forward.1} parent=1 // pred_region
      _
    $region33: #{_fused_forward.1} parent=1 // pred_fallthru
      _
    // Predicated region
    $region34: #{_fused_forward.1} parent=1 // pred_check
      _
    $region35: #{_fused_forward.1} parent=1 // pred_check_branch
      %191 = sbr.rel (0) target = $region37
    $region36: #{_fused_forward.1} parent=1 // pred_region
      _
    $region37: #{_fused_forward.1} parent=1 // pred_fallthru
      _
    // Predicated region
    $region38: #{_fused_forward.1} parent=1 // pred_check
      _
    $region39: #{_fused_forward.1} parent=1 // pred_check_branch
      %193 = sbr.rel (0) target = $region41
    $region40: #{_fused_forward.1} parent=1 // pred_region
      _
    $region41: #{_fused_forward.1} parent=1 // pred_fallthru
      _
    // Predicated region
    $region42: #{_fused_forward.1} parent=1 // pred_check
      _
    $region43: #{_fused_forward.1} parent=1 // pred_check_branch
      %195 = sbr.rel (0) target = $region45
    $region44: #{_fused_forward.1} parent=1 // pred_region
      _
    $region45: #{_fused_forward.1} parent=1 // pred_fallthru
      _
    %196 = vsyncpa [#allocation3], 1

</llo_original>
